<compile_context>
chip_gen: v5e
topology: v5e:2x2
jax: 0.10.0
libtpu: 0.0.40
codegen_flags: <defaults>
</compile_context>

<pallas_src>
import jax
import jax.numpy as jnp
from jax.experimental import pallas as pl
from jax.experimental.pallas import tpu as pltpu


def _scalar_mapping_kernel(x_ref, w_ref, b_ref, o_ref):
    # x_ref: (TB, C, HW)  batch tile, natural layout (HW on lanes)
    # w_ref: (C, HW)      per-channel linear weights (resident)
    # b_ref: (1, C)       per-channel bias (resident)
    # o_ref: (TB, C)      output tile
    x = x_ref[...]                               # (TB, C, HW) f32
    w = w_ref[...]                               # (C, HW)
    red = jnp.sum(x * w[None, :, :], axis=-1)    # VPU multiply + lane reduce -> (TB, C)
    o_ref[...] = (red + b_ref[...]).astype(o_ref.dtype)


def _vmem_limit_bytes():
    """Chip-aware scoped-VMEM limit: half of physical, capped at 64 MiB."""
    try:
        cap = int(pltpu.get_tpu_info().vmem_capacity_bytes)
    except Exception:
        cap = 64 * 1024 * 1024                   # conservative fallback
    return min(cap, 128 * 1024 * 1024) // 2      # 64 MiB v5e/v6e, 32 MiB v7x


def _pick_tb(B, C, HW, budget_bytes):
    """Pick the batch tile TB under a chip-aware VMEM budget.

    Accounts for sublane padding of the C dim in VMEM, double-buffered x/out
    tiles, a possibly-materialized multiply intermediate, and the resident
    weight/bias blocks.  Never rounds tb above the budget-derived maximum.
    """
    bpe = 4                                       # float32
    c_pad = max(8, ((C + 7) // 8) * 8)            # sublane padding of C in VMEM
    per_row = bpe * (2 * c_pad * HW               # x tile, double buffered
                     + c_pad * HW                 # headroom: multiply intermediate
                     + 2 * 128)                   # out tile rows (lane padded), 2 bufs
    fixed = 2 * bpe * (c_pad * HW + 128)          # weights + bias blocks
    avail = max(budget_bytes - fixed, 8 * per_row)
    max_tb = max(8, (avail // per_row) // 8 * 8)  # sublane-aligned, clamped to budget

    cap = 2048                                    # big tiles amortize per-step overhead
    if B >= 256:
        # Guarantee >= 2 grid steps so v7x megacore can use both TensorCores.
        half = -(-B // 2)
        cap = min(cap, -(-half // 8) * 8)

    tb = min(max_tb, cap)
    if B <= tb:
        return int(B)                             # single full-batch block (dim == full)
    return int(tb)


def scalar_mapping(x, weights, bias):
    """
    x       : (B, C, H, W) float32
    weights : (C, H*W) float32   (per-channel Linear weight, squeezed from (1, H*W))
    bias    : (C,) float32       (per-channel Linear bias)
    returns : (B, C, 1) float32
    """
    B, C, H, W = x.shape
    HW = H * W

    x3 = x.reshape(B, C, HW)                      # free contiguous view, no transpose
    bias2d = bias.reshape(1, C)

    limit = _vmem_limit_bytes()
    budget = (limit * 3) // 4
    tb = _pick_tb(B, C, HW, budget)
    bp = pl.cdiv(B, tb) * tb
    if bp != B:
        x3 = jnp.pad(x3, ((0, bp - B), (0, 0), (0, 0)))

    out = pl.pallas_call(
        _scalar_mapping_kernel,
        out_shape=jax.ShapeDtypeStruct((bp, C), jnp.float32),
        grid_spec=pltpu.PrefetchScalarGridSpec(
            num_scalar_prefetch=0,
            grid=(bp // tb,),
            in_specs=[
                pl.BlockSpec((tb, C, HW), lambda i: (i, 0, 0)),  # x batch tile (natural)
                pl.BlockSpec((C, HW), lambda i: (0, 0)),         # weights (resident)
                pl.BlockSpec((1, C), lambda i: (0, 0)),          # bias (resident)
            ],
            out_specs=pl.BlockSpec((tb, C), lambda i: (i, 0)),
        ),
        compiler_params=pltpu.CompilerParams(
            dimension_semantics=("parallel",),                   # megacore-shardable
            vmem_limit_bytes=limit,
        ),
    )(x3, weights, bias2d)

    # Back to the module's (B, C, 1) output layout; drop batch padding.
    return out[:B][:, :, None]


def scalar_mapping_ref(x, weights, bias):
    B, C, H, W = x.shape
    x_flat = x.reshape(B, C, H * W)
    out = jnp.einsum("bcf,cf->bc", x_flat, weights) + bias[None, :]
    return out[:, :, None]


if __name__ == "__main__":
    # Small shapes consistent with the module: conv_block_size = (C, H, W)
    B, C, H, W = 2, 4, 16, 16
    HW = H * W

    key = jax.random.PRNGKey(0)
    kx, kw, kb = jax.random.split(key, 3)

    x = jax.random.normal(kx, (B, C, H, W), dtype=jnp.float32)

    # Deterministic parameter init mimicking nn.Linear: U(-1/sqrt(in), 1/sqrt(in))
    limit = 1.0 / jnp.sqrt(jnp.float32(HW))
    weights = jax.random.uniform(kw, (C, HW), minval=-limit, maxval=limit,
                                 dtype=jnp.float32)
    bias = jax.random.uniform(kb, (C,), minval=-limit, maxval=limit,
                              dtype=jnp.float32)

    out = scalar_mapping(x, weights, bias)
    out = jax.block_until_ready(out)

    ref = scalar_mapping_ref(x, weights, bias)
    assert out.shape == (B, C, 1), f"bad shape {out.shape}"
    assert jnp.allclose(out, ref, atol=1e-5, rtol=1e-5), "mismatch vs reference"

    # Also exercise a larger batch to cover the tiled, multi-grid-step path
    # (>= 2 parallel steps so v7x megacore sharding is exercised too).
    B2 = 300
    x2 = jax.random.normal(jax.random.PRNGKey(1), (B2, C, H, W), dtype=jnp.float32)
    out2 = jax.block_until_ready(scalar_mapping(x2, weights, bias))
    ref2 = scalar_mapping_ref(x2, weights, bias)
    assert out2.shape == (B2, C, 1), f"bad shape {out2.shape}"
    assert jnp.allclose(out2, ref2, atol=1e-5, rtol=1e-5), "mismatch vs reference (tiled)"

    print("KERNEL_OK")
</pallas_src>

<mosaic_0001>
module attributes {stable_mosaic.version = 11 : i64} {
  func.func @_scalar_mapping_kernel(%arg0: i32, %arg1: memref<2x4x256xf32, #tpu.memory_space<vmem>>, %arg2: memref<4x256xf32, #tpu.memory_space<vmem>>, %arg3: memref<1x4xf32, #tpu.memory_space<vmem>>, %arg4: memref<2x4xf32, #tpu.memory_space<vmem>>) attributes {dimension_semantics = [#tpu.dimension_semantics<parallel>], iteration_bounds = array<i64: 1>, scalar_prefetch = 0 : i64, scratch_operands = 0 : i64, tpu.core_type = #tpu.core_type<tc>, window_params = [{transform_indices = @transform_0, window_bounds = array<i64: 2, 4, 256>}, {pipeline_mode = #tpu.pipeline_mode<synchronous>, transform_indices = @transform_1, window_bounds = array<i64: 4, 256>}, {pipeline_mode = #tpu.pipeline_mode<synchronous>, transform_indices = @transform_2, window_bounds = array<i64: 1, 4>}, {transform_indices = @transform_3, window_bounds = array<i64: 2, 4>}]} {
    %c0 = arith.constant 0 : index
    %c0_0 = arith.constant 0 : index
    %c0_1 = arith.constant 0 : index
    %0 = vector.load %arg1[%c0, %c0_0, %c0_1] : memref<2x4x256xf32, #tpu.memory_space<vmem>>, vector<2x4x256xf32>
    %c0_2 = arith.constant 0 : index
    %c0_3 = arith.constant 0 : index
    %1 = vector.load %arg2[%c0_2, %c0_3] : memref<4x256xf32, #tpu.memory_space<vmem>>, vector<4x256xf32>
    %2 = vector.shape_cast %1 : vector<4x256xf32> to vector<1x4x256xf32>
    %3 = vector.broadcast %2 : vector<1x4x256xf32> to vector<2x4x256xf32>
    %4 = arith.mulf %0, %3 : vector<2x4x256xf32>
    %cst = arith.constant dense<0.000000e+00> : vector<2x4xf32>
    %5 = vector.multi_reduction <add>, %4, %cst [2] : vector<2x4x256xf32> to vector<2x4xf32>
    %c0_4 = arith.constant 0 : index
    %c0_5 = arith.constant 0 : index
    %6 = vector.load %arg3[%c0_4, %c0_5] : memref<1x4xf32, #tpu.memory_space<vmem>>, vector<1x4xf32>
    %7 = vector.broadcast %6 : vector<1x4xf32> to vector<2x4xf32>
    %8 = arith.addf %5, %7 : vector<2x4xf32>
    %c0_6 = arith.constant 0 : index
    %c0_7 = arith.constant 0 : index
    %9 = vector.load %arg4[%c0_6, %c0_7] : memref<2x4xf32, #tpu.memory_space<vmem>>, vector<2x4xf32>
    tpu.vector_store %arg4[%c0_6, %c0_7], %8 {strides = array<i32>} : memref<2x4xf32, #tpu.memory_space<vmem>>, vector<2x4xf32>,
    return
  }
  func.func @transform_0(%arg0: i32) -> (i32, i32, i32) {
    %c0_i32 = arith.constant 0 : i32
    %c0_i32_0 = arith.constant 0 : i32
    %c0_i32_1 = arith.constant 0 : i32
    return %arg0, %c0_i32, %c0_i32_0 : i32, i32, i32
  }
  func.func @transform_1(%arg0: i32) -> (i32, i32) {
    %c0_i32 = arith.constant 0 : i32
    %c0_i32_0 = arith.constant 0 : i32
    %c0_i32_1 = arith.constant 0 : i32
    return %c0_i32, %c0_i32_0 : i32, i32
  }
  func.func @transform_2(%arg0: i32) -> (i32, i32) {
    %c0_i32 = arith.constant 0 : i32
    %c0_i32_0 = arith.constant 0 : i32
    %c0_i32_1 = arith.constant 0 : i32
    return %c0_i32, %c0_i32_0 : i32, i32
  }
  func.func @transform_3(%arg0: i32) -> (i32, i32) {
    %c0_i32 = arith.constant 0 : i32
    %c0_i32_0 = arith.constant 0 : i32
    return %arg0, %c0_i32 : i32, i32
  }
}

</mosaic_0001>

<llo_original>
// kernel: tpu_custom_call.1
$region0: #{tpu_custom_call.1}
  #allocation0 [shape = 'u32[]', space=smem, size = 0x4, offset = 0x4, fixed_abs, tag = 'smem constant byte address 0x4 - core index']
  #allocation1 [shape = 'u32[72,128]{1,0:T(1,128)}', space=vmem, size = 0x9000, scoped, tag = 'internal scratch']
  %s0 = inlined_call_operand.hbm [shape: f32[2,4,256], index: 0, kind: input, shape index: {}]
  %s1 = inlined_call_operand.hbm [shape: f32[4,256], index: 1, kind: input, shape index: {}]
  %s2 = inlined_call_operand.vmem [shape: f32[1,4], index: 2, kind: input, shape index: {}]
  %s3 = inlined_call_operand.hbm [shape: f32[2,4], index: 3, kind: output, shape index: {}]
  %s4 = sld [smem:[#allocation0]]
  $region30: #{tpu_custom_call.1} parent=0
    _
  %s6 = ssub.s32 1, %s4
  %s7 = scalar_select 0, %s6, %s4
  $region1: #{tpu_custom_call.1} parent=0
    #allocation2 [shape = 'u8[8192]{0}', space=vmem, size = 0x2000, scoped, tag = 'input window, operand 0, single buffered']
    #allocation3 [shape = 's32[1]{0}', space=sflag, size = 0x4, scoped, tag = 'scoped memory for tpu_custom_call.1']
    #allocation4 [shape = 's32[1]{0}', space=sflag, size = 0x4, scoped, tag = 'scoped memory for tpu_custom_call.1']
    #allocation5 [shape = 'u8[4096]{0}', space=vmem, size = 0x1000, scoped, tag = 'input window, operand 1, single buffered']
    #allocation6 [shape = 's32[1]{0}', space=sflag, size = 0x4, scoped, tag = 'scoped memory for tpu_custom_call.1']
    #allocation7 [shape = 'u8[1024]{0}', space=vmem, size = 0x400, scoped, tag = 'output window, operand 0, single buffered']
    %8 = vsyncpa [#allocation3], 0
    %9 = vsyncpa [#allocation6], 0
    %10 = vsyncpa [#allocation4], 0
    // Predicated region
    $region2: #{tpu_custom_call.1} parent=1 // pred_check
      _
    $region3: #{tpu_custom_call.1} parent=1 // pred_check_branch
      %12 = sbr.rel (0) target = $region5
    $region4: #{tpu_custom_call.1} parent=1 // pred_region
      %14 = vsyncadd [#allocation3], 0
      %s15 = sshll.u32 %s0, 4
      %s16 = int_to_ptr.hbm [resolvable:$true] %s15
      %s17 = sshll.u32 [#allocation2], 4
      %s18 = int_to_ptr.vmem [resolvable:$true] %s17
      %23 = dma.hbm_to_vmem [thread:$0]  %s16, 256, %s18, [#allocation3], 128, 128, 8
    $region5: #{tpu_custom_call.1} parent=1 // pred_fallthru
      _
    // Predicated region
    $region6: #{tpu_custom_call.1} parent=1 // pred_check
      _
    $region7: #{tpu_custom_call.1} parent=1 // pred_check_branch
      %25 = sbr.rel (0) target = $region9
    $region8: #{tpu_custom_call.1} parent=1 // pred_region
      %27 = vsyncadd [#allocation6], 0
      %s29 = sshll.u32 %s1, 4
      %s30 = int_to_ptr.hbm [resolvable:$true] %s29
      %s31 = sshll.u32 [#allocation5], 4
      %s32 = int_to_ptr.vmem [resolvable:$true] %s31
      %34 = dma.hbm_to_vmem [thread:$0]  %s30, 128, %s32, [#allocation6]
    $region9: #{tpu_custom_call.1} parent=1 // pred_fallthru
      _
    // Predicated region
    $region10: #{tpu_custom_call.1} parent=1 // pred_check
      _
    $region11: #{tpu_custom_call.1} parent=1 // pred_check_branch
      %36 = sbr.rel (0) target = $region13
    $region12: #{tpu_custom_call.1} parent=1 // pred_region
      _
    $region13: #{tpu_custom_call.1} parent=1 // pred_fallthru
      _
    // Predicated region
    $region14: #{tpu_custom_call.1} parent=1 // pred_check
      _
    $region15: #{tpu_custom_call.1} parent=1 // pred_check_branch
      %38 = sbr.rel (0) target = $region17
    $region16: #{tpu_custom_call.1} parent=1 // pred_region
      %40 = dma.done [#allocation3], 256
    $region17: #{tpu_custom_call.1} parent=1 // pred_fallthru
      _
    // Predicated region
    $region18: #{tpu_custom_call.1} parent=1 // pred_check
      _
    $region19: #{tpu_custom_call.1} parent=1 // pred_check_branch
      %42 = sbr.rel (0) target = $region21
    $region20: #{tpu_custom_call.1} parent=1 // pred_region
      %44 = dma.done [#allocation6], 128
    $region21: #{tpu_custom_call.1} parent=1 // pred_fallthru
      _
    %v45 = vld [vmem:[#allocation2] sm:$0xff]
    %v46 = vld [vmem:[#allocation2 + $0x8] sm:$0xff]
    %v47 = vld [vmem:[#allocation5] sm:$0xff]
    %v48 = vmul.f32 %v45, %v47
    %v49 = vmul.f32 %v46, %v47
    %52 = vst [vmem:[#allocation1] ss:$2 sm:$0xff] %v48
    %v53 = vld.sshfl [vmem:[#allocation1] sm:$0xff pattern:$0x75316420]
    %v54 = vld.sshfl [vmem:[#allocation1 + $0x8] sm:$0xff pattern:$0x75316420]
    %s55 = scalar_lea.vmem [#allocation1], 16
    %56 = vst [vmem:[%s55] ss:$2 sm:$0xff] %v49
    %v57 = vld.sshfl [vmem:[#allocation1 + $0x10] sm:$0xff pattern:$0x75316420]
    %v58 = vld.sshfl [vmem:[#allocation1 + $0x18] sm:$0xff pattern:$0x75316420]
    %vm63 = vcmask 1043456
    %v64 = vsel %vm63, %v53, 0.0
    %v65 = vsel %vm63, %v54, 0.0
    %v66 = vadd.f32 %v64, %v65
    %67 = vadd.xlane.f32.xlu0 %v66
    %v68 = vpop.xlane.xlu0 %67
    %v69 = vsel %vm63, %v57, 0.0
    %v70 = vsel %vm63, %v58, 0.0
    %v71 = vadd.f32 %v69, %v70
    %72 = vadd.xlane.f32.xlu0 %v71
    %v73 = vpop.xlane.xlu0 %72
    %v74 = vld [vmem:[%s2] sm:$0x1]
    %v76 = vperm.slane %v74, 0
    %v77 = vlaneseq
    %v78 = vshrl.u32 %v77, 7
    %80 = vset.pattern.permute.xlu0 %v78
    %81 = vperm.xlu0 %80, %v76
    %v82 = vpop.permute.xlu0 %81
    %v84 = vadd.f32 %v68, %v82
    %v85 = vadd.f32 %v73, %v82
    %88 = vset.pattern.permute.xlu0 0
    %89 = vperm.xlu0 %88, %v84
    %v90 = vpop.permute.xlu0 %89
    %91 = vset.pattern.permute.xlu0 0
    %92 = vperm.xlu0 %91, %v85
    %v93 = vpop.permute.xlu0 %92
    %v94 = vlaneseq
    %v95 = vand.u32 %v94, 127
    %v96 = vperm.slane %v90, %v95
    %v97 = vperm.slane %v93, %v95
    %vm98 = vcmask 1041409
    %v99 = vsel %vm98, %v97, %v96
    %vm101 = vcmask 25600
    %102 = vst.msk [vmem:[#allocation7] sm:$0x3] %vm101, %v99
    // Predicated region
    $region22: #{tpu_custom_call.1} parent=1 // pred_check
      _
    $region23: #{tpu_custom_call.1} parent=1 // pred_check_branch
      %104 = sbr.rel (0) target = $region25
    $region24: #{tpu_custom_call.1} parent=1 // pred_region
      %106 = vsyncadd [#allocation4], 0
      %s108 = sshll.u32 [#allocation7], 4
      %s109 = int_to_ptr.vmem [resolvable:$true] %s108
      %s110 = sshll.u32 %s3, 4
      %s111 = int_to_ptr.hbm [resolvable:$true] %s110
      %113 = dma.vmem_to_hbm [thread:$0]  %s109, 32, %s111, [#allocation4]
    $region25: #{tpu_custom_call.1} parent=1 // pred_fallthru
      _
    // Predicated region
    $region26: #{tpu_custom_call.1} parent=1 // pred_check
      _
    $region27: #{tpu_custom_call.1} parent=1 // pred_check_branch
      %115 = sbr.rel (0) target = $region29
    $region28: #{tpu_custom_call.1} parent=1 // pred_region
      %117 = dma.done [#allocation4], 32
    $region29: #{tpu_custom_call.1} parent=1 // pred_fallthru
      _
    %118 = vsyncpa [#allocation3], 1
    %119 = vsyncpa [#allocation6], 1
    %120 = vsyncpa [#allocation4], 1

</llo_original>
